<compile_context>
chip_gen: v5e
topology: v5e:2x2
jax: 0.10.0
libtpu: 0.0.40
codegen_flags: <defaults>
</compile_context>

<pallas_src>
import jax
import jax.numpy as jnp
from jax.experimental import pallas as pl
from jax.experimental.pallas import tpu as pltpu


def _round_up(x, m):
    return ((x + m - 1) // m) * m


def _film_proj_kernel(meta_ref, sw_ref, sb_ref, hw_ref, hb_ref,
                      scale_ref, shift_ref):
    # meta_ref: (B, M); sw_ref/hw_ref: (M, D); sb_ref/hb_ref: (1, D)
    meta = meta_ref[...].astype(jnp.float32)
    scale_ref[...] = (jnp.dot(meta, sw_ref[...].astype(jnp.float32),
                              preferred_element_type=jnp.float32)
                      + sb_ref[...])
    shift_ref[...] = (jnp.dot(meta, hw_ref[...].astype(jnp.float32),
                              preferred_element_type=jnp.float32)
                      + hb_ref[...])


def _film_apply_kernel(scale_ref, shift_ref, x_ref, o_ref):
    # scale/shift: (1, B*D) f32 (resident rows); x/o: (seq_tile, B*D) tile.
    x = x_ref[...].astype(jnp.float32)
    o_ref[...] = (x * scale_ref[...] + shift_ref[...]).astype(o_ref.dtype)


def _choose_seq_tile(S, BD, itemsize, max_tile_bytes):
    # Largest multiple-of-8 row tile whose single buffer fits the byte budget,
    # capped at 1024 rows and at the (padded) sequence length.
    tile = min(1024, _round_up(S, 8))
    budget_rows = (max_tile_bytes // max(BD * itemsize, 1)) // 8 * 8
    if budget_rows >= 8:
        tile = min(tile, budget_rows)
    return max(tile, 8)


def feature_modulation(visual_feats, metadata, scale_w, scale_b, shift_w, shift_b,
                       *, max_tile_bytes=4 << 20):
    """FiLM feature modulation.

    visual_feats: (S, B, D)
    metadata:     (B, M)
    scale_w/shift_w: (D, M)   (PyTorch nn.Linear weight layout)
    scale_b/shift_b: (D,)
    returns (S, B, D) = visual_feats * (metadata @ scale_w.T + scale_b)
                        + (metadata @ shift_w.T + shift_b)
    """
    S, B, D = visual_feats.shape
    M = metadata.shape[1]

    # ---- one-shot projection kernel: scale/shift = meta @ W^T + b (f32) ----
    sw_t = scale_w.T                                   # (M, D)
    hw_t = shift_w.T                                   # (M, D)
    sb2 = scale_b.reshape(1, D).astype(jnp.float32)    # (1, D)
    hb2 = shift_b.reshape(1, D).astype(jnp.float32)    # (1, D)

    scale, shift = pl.pallas_call(
        _film_proj_kernel,
        out_shape=(jax.ShapeDtypeStruct((B, D), jnp.float32),
                   jax.ShapeDtypeStruct((B, D), jnp.float32)),
        grid=(1,),
        in_specs=[
            pl.BlockSpec((B, M), lambda i: (0, 0)),    # metadata
            pl.BlockSpec((M, D), lambda i: (0, 0)),    # scale weight^T
            pl.BlockSpec((1, D), lambda i: (0, 0)),    # scale bias
            pl.BlockSpec((M, D), lambda i: (0, 0)),    # shift weight^T
            pl.BlockSpec((1, D), lambda i: (0, 0)),    # shift bias
        ],
        out_specs=(pl.BlockSpec((B, D), lambda i: (0, 0)),
                   pl.BlockSpec((B, D), lambda i: (0, 0))),
    )(metadata, sw_t, sb2, hw_t, hb2)

    # ---- streaming FMA kernel: lane-dense (S, B*D) layout ----
    BD = B * D
    x2 = visual_feats.reshape(S, BD)
    scale_flat = scale.reshape(1, BD)
    shift_flat = shift.reshape(1, BD)

    itemsize = jnp.dtype(visual_feats.dtype).itemsize
    seq_tile = _choose_seq_tile(S, BD, itemsize, max_tile_bytes)
    grid = (pl.cdiv(S, seq_tile),)   # ragged last tile is padded by Pallas

    out2 = pl.pallas_call(
        _film_apply_kernel,
        out_shape=jax.ShapeDtypeStruct((S, BD), visual_feats.dtype),
        grid=grid,
        in_specs=[
            pl.BlockSpec((1, BD), lambda i: (0, 0)),          # scale (resident)
            pl.BlockSpec((1, BD), lambda i: (0, 0)),          # shift (resident)
            pl.BlockSpec((seq_tile, BD), lambda i: (i, 0)),   # visual feats tile
        ],
        out_specs=pl.BlockSpec((seq_tile, BD), lambda i: (i, 0)),
        compiler_params=pltpu.CompilerParams(
            dimension_semantics=("parallel",)),
    )(scale_flat, shift_flat, x2)

    return out2.reshape(S, B, D)


if __name__ == "__main__":
    # Small shapes consistent with the forward signature.
    seq_len, batch, dim, meta_dim = 8, 8, 128, 32

    key = jax.random.PRNGKey(0)
    k1, k2, k3, k4, k5, k6 = jax.random.split(key, 6)

    visual_feats = jax.random.normal(k1, (seq_len, batch, dim), dtype=jnp.float32)
    metadata = jax.random.normal(k2, (batch, meta_dim), dtype=jnp.float32)

    # Deterministic parameter init mimicking nn.Linear (uniform(-1/sqrt(fan_in), ..)).
    bound = 1.0 / (meta_dim ** 0.5)
    scale_w = jax.random.uniform(k3, (dim, meta_dim), minval=-bound, maxval=bound)
    scale_b = jax.random.uniform(k4, (dim,), minval=-bound, maxval=bound)
    shift_w = jax.random.uniform(k5, (dim, meta_dim), minval=-bound, maxval=bound)
    shift_b = jax.random.uniform(k6, (dim,), minval=-bound, maxval=bound)

    out = feature_modulation(visual_feats, metadata,
                             scale_w, scale_b, shift_w, shift_b)
    out = jax.block_until_ready(out)

    # Pure-JAX reference (high-precision matmul for a stable baseline).
    scale_ref = jnp.dot(metadata, scale_w.T,
                        precision=jax.lax.Precision.HIGHEST) + scale_b   # (B, D)
    shift_ref = jnp.dot(metadata, shift_w.T,
                        precision=jax.lax.Precision.HIGHEST) + shift_b   # (B, D)
    ref = visual_feats * scale_ref[None] + shift_ref[None]

    assert out.shape == (seq_len, batch, dim)
    # Tolerance covers any MXU f32-matmul pass-decomposition differences.
    assert jnp.allclose(out, ref, atol=2e-2, rtol=2e-2), "mismatch vs reference"
    print("KERNEL_OK")
</pallas_src>

<mosaic_0001>
module attributes {stable_mosaic.version = 11 : i64} {
  func.func @_film_proj_kernel(%arg0: i32, %arg1: memref<8x32xf32, #tpu.memory_space<vmem>>, %arg2: memref<32x128xf32, #tpu.memory_space<vmem>>, %arg3: memref<1x128xf32, #tpu.memory_space<vmem>>, %arg4: memref<32x128xf32, #tpu.memory_space<vmem>>, %arg5: memref<1x128xf32, #tpu.memory_space<vmem>>, %arg6: memref<8x128xf32, #tpu.memory_space<vmem>>, %arg7: memref<8x128xf32, #tpu.memory_space<vmem>>) attributes {dimension_semantics = [#tpu.dimension_semantics<arbitrary>], iteration_bounds = array<i64: 1>, scalar_prefetch = 0 : i64, scratch_operands = 0 : i64, tpu.core_type = #tpu.core_type<tc>, window_params = [{pipeline_mode = #tpu.pipeline_mode<synchronous>, transform_indices = @transform_0, window_bounds = array<i64: 8, 32>}, {pipeline_mode = #tpu.pipeline_mode<synchronous>, transform_indices = @transform_1, window_bounds = array<i64: 32, 128>}, {pipeline_mode = #tpu.pipeline_mode<synchronous>, transform_indices = @transform_2, window_bounds = array<i64: 1, 128>}, {pipeline_mode = #tpu.pipeline_mode<synchronous>, transform_indices = @transform_3, window_bounds = array<i64: 32, 128>}, {pipeline_mode = #tpu.pipeline_mode<synchronous>, transform_indices = @transform_4, window_bounds = array<i64: 1, 128>}, {pipeline_mode = #tpu.pipeline_mode<synchronous>, transform_indices = @transform_5, window_bounds = array<i64: 8, 128>}, {pipeline_mode = #tpu.pipeline_mode<synchronous>, transform_indices = @transform_6, window_bounds = array<i64: 8, 128>}]} {
    %c0 = arith.constant 0 : index
    %c0_0 = arith.constant 0 : index
    %0 = vector.load %arg1[%c0, %c0_0] : memref<8x32xf32, #tpu.memory_space<vmem>>, vector<8x32xf32>
    %c0_1 = arith.constant 0 : index
    %c0_2 = arith.constant 0 : index
    %1 = vector.load %arg2[%c0_1, %c0_2] : memref<32x128xf32, #tpu.memory_space<vmem>>, vector<32x128xf32>
    %cst = arith.constant dense<0.000000e+00> : vector<8x128xf32>
    %2 = tpu.matmul %0, %1, %cst {dimension_numbers = #tpu.dot_dimension_numbers<[1], [0], [0], [1], [0, 0, 1, 1], [], []>} : vector<8x32xf32>, vector<32x128xf32>, vector<8x128xf32> -> vector<8x128xf32>
    %c0_3 = arith.constant 0 : index
    %c0_4 = arith.constant 0 : index
    %3 = vector.load %arg3[%c0_3, %c0_4] : memref<1x128xf32, #tpu.memory_space<vmem>>, vector<1x128xf32>
    %4 = vector.broadcast %3 : vector<1x128xf32> to vector<8x128xf32>
    %5 = arith.addf %2, %4 : vector<8x128xf32>
    %c0_5 = arith.constant 0 : index
    %c0_6 = arith.constant 0 : index
    %6 = vector.load %arg6[%c0_5, %c0_6] : memref<8x128xf32, #tpu.memory_space<vmem>>, vector<8x128xf32>
    tpu.vector_store %arg6[%c0_5, %c0_6], %5 {strides = array<i32>} : memref<8x128xf32, #tpu.memory_space<vmem>>, vector<8x128xf32>,
    %c0_7 = arith.constant 0 : index
    %c0_8 = arith.constant 0 : index
    %7 = vector.load %arg4[%c0_7, %c0_8] : memref<32x128xf32, #tpu.memory_space<vmem>>, vector<32x128xf32>
    %cst_9 = arith.constant dense<0.000000e+00> : vector<8x128xf32>
    %8 = tpu.matmul %0, %7, %cst_9 {dimension_numbers = #tpu.dot_dimension_numbers<[1], [0], [0], [1], [0, 0, 1, 1], [], []>} : vector<8x32xf32>, vector<32x128xf32>, vector<8x128xf32> -> vector<8x128xf32>
    %c0_10 = arith.constant 0 : index
    %c0_11 = arith.constant 0 : index
    %9 = vector.load %arg5[%c0_10, %c0_11] : memref<1x128xf32, #tpu.memory_space<vmem>>, vector<1x128xf32>
    %10 = vector.broadcast %9 : vector<1x128xf32> to vector<8x128xf32>
    %11 = arith.addf %8, %10 : vector<8x128xf32>
    %c0_12 = arith.constant 0 : index
    %c0_13 = arith.constant 0 : index
    %12 = vector.load %arg7[%c0_12, %c0_13] : memref<8x128xf32, #tpu.memory_space<vmem>>, vector<8x128xf32>
    tpu.vector_store %arg7[%c0_12, %c0_13], %11 {strides = array<i32>} : memref<8x128xf32, #tpu.memory_space<vmem>>, vector<8x128xf32>,
    return
  }
  func.func @transform_0(%arg0: i32) -> (i32, i32) {
    %c0_i32 = arith.constant 0 : i32
    %c0_i32_0 = arith.constant 0 : i32
    %c0_i32_1 = arith.constant 0 : i32
    return %c0_i32, %c0_i32_0 : i32, i32
  }
  func.func @transform_1(%arg0: i32) -> (i32, i32) {
    %c0_i32 = arith.constant 0 : i32
    %c0_i32_0 = arith.constant 0 : i32
    %c0_i32_1 = arith.constant 0 : i32
    return %c0_i32, %c0_i32_0 : i32, i32
  }
  func.func @transform_2(%arg0: i32) -> (i32, i32) {
    %c0_i32 = arith.constant 0 : i32
    %c0_i32_0 = arith.constant 0 : i32
    %c0_i32_1 = arith.constant 0 : i32
    return %c0_i32, %c0_i32_0 : i32, i32
  }
  func.func @transform_3(%arg0: i32) -> (i32, i32) {
    %c0_i32 = arith.constant 0 : i32
    %c0_i32_0 = arith.constant 0 : i32
    %c0_i32_1 = arith.constant 0 : i32
    return %c0_i32, %c0_i32_0 : i32, i32
  }
  func.func @transform_4(%arg0: i32) -> (i32, i32) {
    %c0_i32 = arith.constant 0 : i32
    %c0_i32_0 = arith.constant 0 : i32
    %c0_i32_1 = arith.constant 0 : i32
    return %c0_i32, %c0_i32_0 : i32, i32
  }
  func.func @transform_5(%arg0: i32) -> (i32, i32) {
    %c0_i32 = arith.constant 0 : i32
    %c0_i32_0 = arith.constant 0 : i32
    %c0_i32_1 = arith.constant 0 : i32
    return %c0_i32, %c0_i32_0 : i32, i32
  }
  func.func @transform_6(%arg0: i32) -> (i32, i32) {
    %c0_i32 = arith.constant 0 : i32
    %c0_i32_0 = arith.constant 0 : i32
    %c0_i32_1 = arith.constant 0 : i32
    return %c0_i32, %c0_i32_0 : i32, i32
  }
}

</mosaic_0001>

<llo_original>
// kernel: tpu_custom_call.1
$region0: #{tpu_custom_call.1}
  #allocation0 [shape = 'u32[]', space=smem, size = 0x4, offset = 0x4, fixed_abs, tag = 'smem constant byte address 0x4 - core index']
  #allocation1 [shape = 'u32[72,128]{1,0:T(1,128)}', space=vmem, size = 0x9000, scoped, tag = 'internal scratch']
  %s0 = inlined_call_operand.hbm [shape: f32[8,32], index: 0, kind: input, shape index: {}]
  %s1 = inlined_call_operand.hbm [shape: f32[32,128], index: 1, kind: input, shape index: {}]
  %s2 = inlined_call_operand.vmem [shape: f32[1,128], index: 2, kind: input, shape index: {}]
  %s3 = inlined_call_operand.hbm [shape: f32[32,128], index: 3, kind: input, shape index: {}]
  %s4 = inlined_call_operand.vmem [shape: f32[1,128], index: 4, kind: input, shape index: {}]
  %s5 = inlined_call_operand.hbm [shape: f32[8,128], index: 5, kind: output, shape index: {0}]
  %s6 = inlined_call_operand.hbm [shape: f32[8,128], index: 6, kind: output, shape index: {1}]
  %7 = xla_tuple %s5, %s6
  %s8 = sld [smem:[#allocation0]]
  $region50: #{tpu_custom_call.1} parent=0
    _
  %s10 = ssub.s32 1, %s8
  %s11 = scalar_select 0, %s10, %s8
  $region1: #{tpu_custom_call.1} parent=0
    #allocation2 [shape = 'u8[4096]{0}', space=vmem, size = 0x1000, scoped, tag = 'input window, operand 0, single buffered']
    #allocation3 [shape = 's32[1]{0}', space=sflag, size = 0x4, scoped, tag = 'scoped memory for tpu_custom_call.1']
    #allocation4 [shape = 's32[1]{0}', space=sflag, size = 0x4, scoped, tag = 'scoped memory for tpu_custom_call.1']
    #allocation5 [shape = 'u8[16384]{0}', space=vmem, size = 0x4000, scoped, tag = 'input window, operand 1, single buffered']
    #allocation6 [shape = 's32[1]{0}', space=sflag, size = 0x4, scoped, tag = 'scoped memory for tpu_custom_call.1']
    #allocation7 [shape = 'u8[16384]{0}', space=vmem, size = 0x4000, scoped, tag = 'input window, operand 3, single buffered']
    #allocation8 [shape = 'u8[4096]{0}', space=vmem, size = 0x1000, scoped, tag = 'output window, operand 0, single buffered']
    #allocation9 [shape = 'u8[4096]{0}', space=vmem, size = 0x1000, scoped, tag = 'output window, operand 1, single buffered']
    #allocation10 [shape = 's32[1]{0}', space=sflag, size = 0x4, scoped, tag = 'scoped memory for tpu_custom_call.1']
    %12 = vsyncpa [#allocation3], 0
    %13 = vsyncpa [#allocation6], 0
    %14 = vsyncpa [#allocation4], 0
    %15 = vsyncpa [#allocation10], 0
    // Predicated region
    $region2: #{tpu_custom_call.1} parent=1 // pred_check
      _
    $region3: #{tpu_custom_call.1} parent=1 // pred_check_branch
      %17 = sbr.rel (0) target = $region5
    $region4: #{tpu_custom_call.1} parent=1 // pred_region
      %19 = vsyncadd [#allocation3], 0
      %s21 = sshll.u32 %s0, 4
      %s22 = int_to_ptr.hbm [resolvable:$true] %s21
      %s23 = sshll.u32 [#allocation2], 4
      %s24 = int_to_ptr.vmem [resolvable:$true] %s23
      %26 = dma.hbm_to_vmem [thread:$0]  %s22, 128, %s24, [#allocation3]
    $region5: #{tpu_custom_call.1} parent=1 // pred_fallthru
      _
    // Predicated region
    $region6: #{tpu_custom_call.1} parent=1 // pred_check
      _
    $region7: #{tpu_custom_call.1} parent=1 // pred_check_branch
      %28 = sbr.rel (0) target = $region9
    $region8: #{tpu_custom_call.1} parent=1 // pred_region
      %30 = vsyncadd [#allocation6], 0
      %s31 = sshll.u32 %s1, 4
      %s32 = int_to_ptr.hbm [resolvable:$true] %s31
      %s33 = sshll.u32 [#allocation5], 4
      %s34 = int_to_ptr.vmem [resolvable:$true] %s33
      %39 = dma.hbm_to_vmem [thread:$0]  %s32, 512, %s34, [#allocation6], 128, 128, 8
    $region9: #{tpu_custom_call.1} parent=1 // pred_fallthru
      _
    // Predicated region
    $region10: #{tpu_custom_call.1} parent=1 // pred_check
      _
    $region11: #{tpu_custom_call.1} parent=1 // pred_check_branch
      %41 = sbr.rel (0) target = $region13
    $region12: #{tpu_custom_call.1} parent=1 // pred_region
      _
    $region13: #{tpu_custom_call.1} parent=1 // pred_fallthru
      _
    // Predicated region
    $region14: #{tpu_custom_call.1} parent=1 // pred_check
      _
    $region15: #{tpu_custom_call.1} parent=1 // pred_check_branch
      %43 = sbr.rel (0) target = $region17
    $region16: #{tpu_custom_call.1} parent=1 // pred_region
      %45 = vsyncadd [#allocation6], 0
      %s46 = sshll.u32 %s3, 4
      %s47 = int_to_ptr.hbm [resolvable:$true] %s46
      %s48 = sshll.u32 [#allocation7], 4
      %s49 = int_to_ptr.vmem [resolvable:$true] %s48
      %54 = dma.hbm_to_vmem [thread:$0]  %s47, 512, %s49, [#allocation6], 128, 128, 8
    $region17: #{tpu_custom_call.1} parent=1 // pred_fallthru
      _
    // Predicated region
    $region18: #{tpu_custom_call.1} parent=1 // pred_check
      _
    $region19: #{tpu_custom_call.1} parent=1 // pred_check_branch
      %56 = sbr.rel (0) target = $region21
    $region20: #{tpu_custom_call.1} parent=1 // pred_region
      _
    $region21: #{tpu_custom_call.1} parent=1 // pred_fallthru
      _
    // Predicated region
    $region22: #{tpu_custom_call.1} parent=1 // pred_check
      _
    $region23: #{tpu_custom_call.1} parent=1 // pred_check_branch
      %58 = sbr.rel (0) target = $region25
    $region24: #{tpu_custom_call.1} parent=1 // pred_region
      %60 = dma.done [#allocation3], 128
    $region25: #{tpu_custom_call.1} parent=1 // pred_fallthru
      _
    // Predicated region
    $region26: #{tpu_custom_call.1} parent=1 // pred_check
      _
    $region27: #{tpu_custom_call.1} parent=1 // pred_check_branch
      %62 = sbr.rel (0) target = $region29
    $region28: #{tpu_custom_call.1} parent=1 // pred_region
      %64 = dma.done [#allocation6], 512
    $region29: #{tpu_custom_call.1} parent=1 // pred_fallthru
      _
    // Predicated region
    $region30: #{tpu_custom_call.1} parent=1 // pred_check
      _
    $region31: #{tpu_custom_call.1} parent=1 // pred_check_branch
      %66 = sbr.rel (0) target = $region33
    $region32: #{tpu_custom_call.1} parent=1 // pred_region
      %68 = dma.done [#allocation6], 512
    $region33: #{tpu_custom_call.1} parent=1 // pred_fallthru
      _
    %v69 = vld [vmem:[#allocation2] sm:$0xff]
    %v70 = vld [vmem:[#allocation5] sm:$0xff]
    %v71 = vld [vmem:[#allocation5 + $0x8] sm:$0xff]
    %v72 = vld [vmem:[#allocation5 + $0x10] sm:$0xff]
    %v73 = vld [vmem:[#allocation5 + $0x18] sm:$0xff]
    %v74 = vld [vmem:[%s2] sm:$0x1]
    %v76 = vperm.slane %v74, 0
    %vm78 = vcmask 261120
    %v80 = vsel %vm78, %v69, 0
    %82 = vmatpush.msra.mxu0 0.0
    %83 = vmatpush.msra.mxu0 0.0
    %84 = vmatpush.msra.mxu0 0.0
    %85 = vmatpush.msra.mxu0 0.0
    %86 = vmatpush.msra.mxu0 0.0
    %87 = vmatpush.msra.mxu0 0.0
    %88 = vmatpush.msra.mxu0 0.0
    %89 = vmatpush.msra.mxu0 0.0
    %90 = vmatpush.msra.mxu0 0.0
    %91 = vmatpush.msra.mxu0 0.0
    %92 = vmatpush.msra.mxu0 0.0
    %93 = vmatpush.msra.mxu0 0.0
    %94 = vmatpush.msra.mxu0 %v73
    %95 = vmatpush.msra.mxu0 %v72
    %96 = vmatpush.msra.mxu0 %v71
    %97 = vmatpush.msra.mxu0 %v70
    %98 = vmatmul.f32.gmra.mxu0 %v80
    %v99 = vpop.f32.mrf.mxu0
    %v100 = vadd.f32 %v76, %v99
    %101 = vdwg.mxu0
    %102 = vst [vmem:[#allocation8] sm:$0xff] %v100
    %v103 = vld [vmem:[#allocation7] sm:$0xff]
    %v104 = vld [vmem:[#allocation7 + $0x8] sm:$0xff]
    %v105 = vld [vmem:[#allocation7 + $0x10] sm:$0xff]
    %v106 = vld [vmem:[#allocation7 + $0x18] sm:$0xff]
    %v107 = vld [vmem:[%s4] sm:$0x1]
    %v109 = vperm.slane %v107, 0
    %111 = vmatpush.msra.mxu0 0.0
    %112 = vmatpush.msra.mxu0 0.0
    %113 = vmatpush.msra.mxu0 0.0
    %114 = vmatpush.msra.mxu0 0.0
    %115 = vmatpush.msra.mxu0 0.0
    %116 = vmatpush.msra.mxu0 0.0
    %117 = vmatpush.msra.mxu0 0.0
    %118 = vmatpush.msra.mxu0 0.0
    %119 = vmatpush.msra.mxu0 0.0
    %120 = vmatpush.msra.mxu0 0.0
    %121 = vmatpush.msra.mxu0 0.0
    %122 = vmatpush.msra.mxu0 0.0
    %123 = vmatpush.msra.mxu0 %v106
    %124 = vmatpush.msra.mxu0 %v105
    %125 = vmatpush.msra.mxu0 %v104
    %126 = vmatpush.msra.mxu0 %v103
    %127 = vmatmul.f32.gmra.mxu0 %v80
    %v128 = vpop.f32.mrf.mxu0
    %v129 = vadd.f32 %v109, %v128
    %130 = vdwg.mxu0
    %131 = vst [vmem:[#allocation9] sm:$0xff] %v129
    // Predicated region
    $region34: #{tpu_custom_call.1} parent=1 // pred_check
      _
    $region35: #{tpu_custom_call.1} parent=1 // pred_check_branch
      %133 = sbr.rel (0) target = $region37
    $region36: #{tpu_custom_call.1} parent=1 // pred_region
      %135 = vsyncadd [#allocation4], 0
      %s137 = sshll.u32 [#allocation8], 4
      %s138 = int_to_ptr.vmem [resolvable:$true] %s137
      %s139 = sshll.u32 %s5, 4
      %s140 = int_to_ptr.hbm [resolvable:$true] %s139
      %142 = dma.vmem_to_hbm [thread:$0]  %s138, 128, %s140, [#allocation4]
    $region37: #{tpu_custom_call.1} parent=1 // pred_fallthru
      _
    // Predicated region
    $region38: #{tpu_custom_call.1} parent=1 // pred_check
      _
    $region39: #{tpu_custom_call.1} parent=1 // pred_check_branch
      %144 = sbr.rel (0) target = $region41
    $region40: #{tpu_custom_call.1} parent=1 // pred_region
      %146 = vsyncadd [#allocation10], 0
      %s148 = sshll.u32 [#allocation9], 4
      %s149 = int_to_ptr.vmem [resolvable:$true] %s148
      %s150 = sshll.u32 %s6, 4
      %s151 = int_to_ptr.hbm [resolvable:$true] %s150
      %153 = dma.vmem_to_hbm [thread:$0]  %s149, 128, %s151, [#allocation10]
    $region41: #{tpu_custom_call.1} parent=1 // pred_fallthru
      _
    // Predicated region
    $region42: #{tpu_custom_call.1} parent=1 // pred_check
      _
    $region43: #{tpu_custom_call.1} parent=1 // pred_check_branch
      %155 = sbr.rel (0) target = $region45
    $region44: #{tpu_custom_call.1} parent=1 // pred_region
      %157 = dma.done [#allocation4], 128
    $region45: #{tpu_custom_call.1} parent=1 // pred_fallthru
      _
    // Predicated region
    $region46: #{tpu_custom_call.1} parent=1 // pred_check
      _
    $region47: #{tpu_custom_call.1} parent=1 // pred_check_branch
      %159 = sbr.rel (0) target = $region49
    $region48: #{tpu_custom_call.1} parent=1 // pred_region
      %161 = dma.done [#allocation10], 128
    $region49: #{tpu_custom_call.1} parent=1 // pred_fallthru
      _
    %162 = vsyncpa [#allocation3], 1
    %163 = vsyncpa [#allocation6], 1
    %164 = vsyncpa [#allocation4], 1
    %165 = vsyncpa [#allocation10], 1

</llo_original>
